<compile_context>
chip_gen: v7x
topology: tpu7x:2x2x1
jax: 0.10.0
libtpu: 0.0.40
codegen_flags: <defaults>
</compile_context>

<pallas_src>
import jax
import jax.numpy as jnp
from jax.experimental import pallas as pl
from jax.experimental.pallas import tpu as pltpu


# ------------------------------------------------------------------ kernels --

def _linear_explanation_scalar_kernel(e_ref, z_ref, o_ref):
    """e_ref, z_ref: (1, S) in VMEM.  o_ref: (1,) scalar in SMEM."""
    e = e_ref[...].astype(jnp.float32)          # (1, S)
    z = z_ref[...].astype(jnp.float32)          # (1, S)
    # bias = effect_vector[0]; dot on the VPU/XLU; scalar goes out via SMEM.
    o_ref[0] = e[0, 0] + jnp.sum(e * z)


def _linear_explanation_batched_kernel(e_ref, z_ref, o_ref):
    """e_ref: (S, 1) VMEM, z_ref: (B, S) VMEM, o_ref: (B, 1) VMEM."""
    e = e_ref[...].astype(jnp.float32)          # (S, 1)
    z = z_ref[...].astype(jnp.float32)          # (B, S)
    dots = jnp.dot(z, e, preferred_element_type=jnp.float32)   # (B, 1) matvec
    o_ref[...] = (dots + e[:1, :1]).astype(o_ref.dtype)        # + effect_vector[0]


# ----------------------------------------------------------------- wrappers --

def linear_explanation_forward_xla(effect_vector: jax.Array, z: jax.Array) -> jax.Array:
    """Plain-XLA path: at size=10 this fuses with surrounding ops and beats any kernel."""
    return effect_vector[0] + jnp.dot(effect_vector, z)


@jax.jit
def linear_explanation_forward(effect_vector: jax.Array, z: jax.Array) -> jax.Array:
    """g(z) = effect_vector[0] + dot(effect_vector, z); scalar result."""
    size = effect_vector.shape[0]
    assert z.shape == (size,), "z must match effect_vector length"
    out = pl.pallas_call(
        _linear_explanation_scalar_kernel,
        out_shape=jax.ShapeDtypeStruct((1,), jnp.float32),
        in_specs=[
            pl.BlockSpec(memory_space=pltpu.MemorySpace.VMEM),
            pl.BlockSpec(memory_space=pltpu.MemorySpace.VMEM),
        ],
        out_specs=pl.BlockSpec(memory_space=pltpu.MemorySpace.SMEM),
    )(effect_vector.reshape(1, size), z.reshape(1, size))
    return out[0]


@jax.jit
def linear_explanation_forward_batched(effect_vector: jax.Array, zs: jax.Array) -> jax.Array:
    """Batched g: zs has shape (B, size); returns shape (B,). One kernel, one matvec."""
    size = effect_vector.shape[0]
    batch = zs.shape[0]
    assert zs.shape == (batch, size), "zs must be (B, size)"
    out = pl.pallas_call(
        _linear_explanation_batched_kernel,
        out_shape=jax.ShapeDtypeStruct((batch, 1), jnp.float32),
        in_specs=[
            pl.BlockSpec(memory_space=pltpu.MemorySpace.VMEM),
            pl.BlockSpec(memory_space=pltpu.MemorySpace.VMEM),
        ],
        out_specs=pl.BlockSpec(memory_space=pltpu.MemorySpace.VMEM),
    )(effect_vector.reshape(size, 1), zs)
    return out[:, 0]


# --------------------------------------------------------------------- main --

if __name__ == "__main__":
    size = 10    # matches the module default
    batch = 8    # small batch of perturbations (LIME-style usage)

    key = jax.random.PRNGKey(0)
    k_e, k_z, k_zs = jax.random.split(key, 3)
    effect_vector = jax.random.normal(k_e, (size,), dtype=jnp.float32)
    z = jax.random.normal(k_z, (size,), dtype=jnp.float32)
    zs = jax.random.normal(k_zs, (batch, size), dtype=jnp.float32)

    # single-z path (exact module semantics, SMEM scalar output)
    result = jax.block_until_ready(linear_explanation_forward(effect_vector, z))
    ref = effect_vector[0] + jnp.dot(effect_vector, z)
    assert jnp.allclose(result, ref, rtol=1e-5, atol=1e-5), (result, ref)

    # batched path (one kernel for the whole batch)
    result_b = jax.block_until_ready(
        linear_explanation_forward_batched(effect_vector, zs))
    ref_b = effect_vector[0] + zs @ effect_vector
    assert jnp.allclose(result_b, ref_b, rtol=1e-5, atol=1e-5), (result_b, ref_b)

    # sanity check the fused-XLA fast path matches too
    assert jnp.allclose(linear_explanation_forward_xla(effect_vector, z), ref,
                        rtol=1e-5, atol=1e-5)

    print("KERNEL_OK")
</pallas_src>

<mosaic_0001>
module attributes {stable_mosaic.version = 11 : i64} {
  func.func @_linear_explanation_scalar_kernel(%arg0: memref<1x10xf32, #tpu.memory_space<vmem>>, %arg1: memref<1x10xf32, #tpu.memory_space<vmem>>, %arg2: memref<1xf32, #tpu.memory_space<smem>>) attributes {dimension_semantics = [], scalar_prefetch = 0 : i64, scratch_operands = 0 : i64, tpu.core_type = #tpu.core_type<tc>} {
    %c0 = arith.constant 0 : index
    %c0_0 = arith.constant 0 : index
    %0 = vector.load %arg0[%c0, %c0_0] : memref<1x10xf32, #tpu.memory_space<vmem>>, vector<1x10xf32>
    %c0_1 = arith.constant 0 : index
    %c0_2 = arith.constant 0 : index
    %1 = vector.load %arg1[%c0_1, %c0_2] : memref<1x10xf32, #tpu.memory_space<vmem>>, vector<1x10xf32>
    %2 = vector.extract_strided_slice %0 {offsets = [0, 0], sizes = [1, 1], strides = [1, 1]} : vector<1x10xf32> to vector<1x1xf32>
    %3 = vector.extract %2[0, 0] : f32 from vector<1x1xf32>
    %4 = arith.mulf %0, %1 : vector<1x10xf32>
    %5 = vector.shape_cast %4 : vector<1x10xf32> to vector<1x1x10xf32>
    %cst = arith.constant dense<0.000000e+00> : vector<1xf32>
    %6 = vector.multi_reduction <add>, %5, %cst [1, 2] : vector<1x1x10xf32> to vector<1xf32>
    %7 = vector.shape_cast %6 : vector<1xf32> to vector<1x1x1xf32>
    %8 = vector.extract %7[0, 0, 0] : f32 from vector<1x1x1xf32>
    %9 = arith.addf %3, %8 : f32
    %c0_3 = arith.constant 0 : index
    %10 = memref.load %arg2[%c0_3] : memref<1xf32, #tpu.memory_space<smem>>
    memref.store %9, %arg2[%c0_3] : memref<1xf32, #tpu.memory_space<smem>>
    return
  }
}

</mosaic_0001>

<llo_original>
// kernel: linear_explanation_forward.1
$region0: #{linear_explanation_forward.1}
  #allocation0 [shape = 'u32[]', space=smem, size = 0x4, offset = 0x4, fixed_abs, tag = 'smem constant byte address 0x4 - core index']
  #allocation1 [shape = 'u32[144,128]{1,0:T(1,128)}', space=vmem, size = 0x12000, scoped, tag = 'internal scratch']
  %s0 = inlined_call_operand.vmem [shape: f32[1,10], index: 0, kind: input, shape index: {}]
  %s1 = inlined_call_operand.vmem [shape: f32[1,10], index: 1, kind: input, shape index: {}]
  %s2 = inlined_call_operand.hbm [shape: f32[1], index: 2, kind: output, shape index: {}]
  %s3 = sld [smem:[#allocation0]]
  $region18: #{linear_explanation_forward.1} parent=0
    _
  %s5 = ssub.s32 1, %s3
  %s6 = scalar_select 0, %s5, %s3
  $region1: #{linear_explanation_forward.1} parent=0
    #allocation2 [shape = 'u8[512]{0}', space=smem, size = 0x200, scoped, tag = 'output window, operand 0, single buffered']
    #allocation3 [shape = 's32[1]{0}', space=sflag, size = 0x4, scoped, tag = 'scoped memory for linear_explanation_forward.1']
    %7 = vsyncpa [#allocation3], 0
    // Predicated region
    $region2: #{linear_explanation_forward.1} parent=1 // pred_check
      _
    $region3: #{linear_explanation_forward.1} parent=1 // pred_check_branch
      %9 = sbr.rel (0) target = $region5
    $region4: #{linear_explanation_forward.1} parent=1 // pred_region
      _
    $region5: #{linear_explanation_forward.1} parent=1 // pred_fallthru
      _
    // Predicated region
    $region6: #{linear_explanation_forward.1} parent=1 // pred_check
      _
    $region7: #{linear_explanation_forward.1} parent=1 // pred_check_branch
      %11 = sbr.rel (0) target = $region9
    $region8: #{linear_explanation_forward.1} parent=1 // pred_region
      _
    $region9: #{linear_explanation_forward.1} parent=1 // pred_fallthru
      _
    %v12 = vld [vmem:[%s0] sm:$0x1]
    %v13 = vld [vmem:[%s1] sm:$0x1]
    %s14 = vtos %v12
    %v15 = vmul.f32 %v12, %v13
    %vm16 = vcmask 73728
    %v17 = vsel %vm16, %v15, 0.0
    %18 = vadd.xlane.f32.xlu0 %v17
    %v19 = vpop.xlane.xlu0 %18
    %v20 = vrot.slane %v19, 4
    %v21 = vadd.f32 %v19, %v20
    %v22 = vrot.slane %v21, 2
    %v23 = vadd.f32 %v21, %v22
    %v24 = vrot.slane %v23, 1
    %v25 = vadd.f32 %v23, %v24
    %s26 = vtos %v25
    %s27 = sadd.f32 %s14, %s26
    %s28 = scalar_lea.smem [#allocation2], 0
    %29 = sst [smem:[%s28]] %s27
    // Predicated region
    $region10: #{linear_explanation_forward.1} parent=1 // pred_check
      _
    $region11: #{linear_explanation_forward.1} parent=1 // pred_check_branch
      %31 = sbr.rel (0) target = $region13
    $region12: #{linear_explanation_forward.1} parent=1 // pred_region
      %s33 = ssub.s32 16, 16
      %34 = vsyncadd [#allocation3], %s33
      %37 = dma.smem_to_hbm [#allocation2], 16, %s2, [#allocation3]
    $region13: #{linear_explanation_forward.1} parent=1 // pred_fallthru
      _
    // Predicated region
    $region14: #{linear_explanation_forward.1} parent=1 // pred_check
      _
    $region15: #{linear_explanation_forward.1} parent=1 // pred_check_branch
      %39 = sbr.rel (0) target = $region17
    $region16: #{linear_explanation_forward.1} parent=1 // pred_region
      %40 = dma.done [#allocation3], 16
    $region17: #{linear_explanation_forward.1} parent=1 // pred_fallthru
      _
    %41 = sfence
    %42 = vsyncpa [#allocation3], 1

</llo_original>
